<compile_context>
chip_gen: v7x
topology: tpu7x:2x2x1
jax: 0.10.0
libtpu: 0.0.40
codegen_flags: <defaults>
</compile_context>

<pallas_src>
import math
import warnings
import functools

import jax
import jax.numpy as jnp
from jax.experimental import pallas as pl
from jax.experimental.pallas import tpu as pltpu


def _cdiv(a, b):
    return -(-a // b)


# ----------------------------- Pallas kernel ------------------------------ #

def _specaug_kernel(params_ref,            # SMEM int32 (2*(nfm+ntm), Bp)
                    x_ref, o_ref,          # VMEM (bb, F, Tt)
                    *, nfm, ntm, bb):
    g = pl.program_id(0)                   # batch-block index
    t = pl.program_id(1)                   # time-tile index
    _, F, Tt = x_ref.shape
    t_off = t * Tt                         # global time offset of this tile

    # Small separable iotas (TPU iota must be >= 2D), hoisted out of the
    # per-batch loop.
    fidx = jax.lax.broadcasted_iota(jnp.int32, (F, 1), 0)            # (F, 1)
    tidx = jax.lax.broadcasted_iota(jnp.int32, (1, Tt), 1) + t_off   # (1, Tt)

    zero = jnp.zeros((), dtype=x_ref.dtype)  # explicit dtype: no f32 upcast

    for lb in range(bb):                   # bb is small and static (unrolled)
        b = g * bb + lb                    # global batch index
        # Frequency masks (PyTorch axis=1):  pos <= idx < pos + len
        fmask = jnp.zeros((F, 1), dtype=jnp.bool_)
        for m in range(nfm):
            p = params_ref[m, b]
            l = params_ref[nfm + m, b]
            fmask = fmask | ((fidx >= p) & (fidx < p + l))
        # Time masks (PyTorch axis=2)
        tmask = jnp.zeros((1, Tt), dtype=jnp.bool_)
        for m in range(ntm):
            p = params_ref[2 * nfm + m, b]
            l = params_ref[2 * nfm + ntm + m, b]
            tmask = tmask | ((tidx >= p) & (tidx < p + l))
        # One broadcast OR + one select over the (F, Tt) tile; jnp.where keeps
        # exact masked_fill semantics (masked NaN/Inf -> 0).
        o_ref[lb] = jnp.where(fmask | tmask, zero, x_ref[lb])


# ----------------------------- block selection ----------------------------- #

def _tpu_defaults():
    """(target block bytes, vmem limit bytes) tuned per TPU generation."""
    try:
        kind = jax.devices()[0].device_kind.lower()
    except Exception:  # pragma: no cover - defensive only
        kind = ""
    if "v7" in kind:
        # ~3.2 TB/s HBM per TC: bigger blocks amortize the ~0.35us/step grid
        # overhead; only 64 MiB physical VMEM -> keep the limit <= 48 MiB
        # (double-buffered in+out of an 8 MiB block = 32 MiB).
        return 8 << 20, 48 << 20
    # v5e/v6e: ~4 MiB blocks already sit on the HBM roofline; 128 MiB VMEM.
    return 4 << 20, 32 << 20


def _choose_blocks(B, F, T, itemsize, target_bytes):
    """Pick (bb, tile_t, grid_b, grid_t).

    tile_t: full T when one batch slice fits the target (full-array dims are
    exempt from the /128 rule), otherwise a multiple of 128 so a single block
    stays bounded regardless of F*T.  bb folds several batches into one block
    as a secondary knob; it does NOT have to divide B (ragged edge blocks are
    handled by Pallas; params are padded in the wrapper).
    """
    per_batch = F * T * itemsize
    if per_batch <= target_bytes or T <= 128:
        tile_t = T
    else:
        tile_t = max(128, (target_bytes // (F * itemsize)) // 128 * 128)
        tile_t = min(tile_t, _cdiv(T, 128) * 128)
    grid_t = _cdiv(T, tile_t)

    per_block = F * tile_t * itemsize
    bb = int(max(1, min(B, 8, target_bytes // max(1, per_block))))
    # Megacore (v7x shards "parallel" axes over 2 TCs): keep a few grid steps
    # so the cores can overlap next-block input DMA with output writeback.
    while bb > 1 and _cdiv(B, bb) * grid_t < 4:
        bb -= 1
    grid_b = _cdiv(B, bb)
    return bb, tile_t, grid_b, grid_t


# ------------------------------ host wrapper ------------------------------- #

def specaug_pallas(x, fpos, flen, tpos, tlen, *,
                   target_block_bytes=None, vmem_limit_bytes=None):
    """Apply the combined freq/time zero-mask with a Pallas kernel.

    x:          (B, F, T) float array
    fpos/flen:  (B, num_freq_masks) int32
    tpos/tlen:  (B, num_time_masks) int32
    """
    B, F, T = x.shape
    nfm = int(fpos.shape[1])
    ntm = int(tpos.shape[1])
    if nfm == 0 and ntm == 0:
        return x

    default_block, default_vmem = _tpu_defaults()
    if target_block_bytes is None:
        target_block_bytes = default_block
    if vmem_limit_bytes is None:
        vmem_limit_bytes = default_vmem

    bb, tile_t, grid_b, grid_t = _choose_blocks(
        B, F, T, x.dtype.itemsize, target_block_bytes)

    # Pack all mask scalars into one SMEM-friendly int32 array, batch axis
    # last: rows = [fpos | flen | tpos | tlen], cols = batch.  Pad the batch
    # axis so an overhanging last batch block reads in-bounds (zero-length
    # masks; the corresponding output rows are dropped by Pallas anyway).
    params = jnp.concatenate(
        [fpos.T, flen.T, tpos.T, tlen.T], axis=0).astype(jnp.int32)
    Bp = grid_b * bb
    if Bp > B:
        params = jnp.pad(params, ((0, 0), (0, Bp - B)))

    kernel = functools.partial(_specaug_kernel, nfm=nfm, ntm=ntm, bb=bb)

    out = pl.pallas_call(
        kernel,
        out_shape=jax.ShapeDtypeStruct((B, F, T), x.dtype),
        grid_spec=pltpu.PrefetchScalarGridSpec(
            num_scalar_prefetch=1,
            grid=(grid_b, grid_t),
            in_specs=[pl.BlockSpec((bb, F, tile_t),
                                   lambda g, t, params: (g, 0, t))],
            out_specs=pl.BlockSpec((bb, F, tile_t),
                                   lambda g, t, params: (g, 0, t)),
        ),
        compiler_params=pltpu.CompilerParams(
            dimension_semantics=("parallel", "parallel"),
            vmem_limit_bytes=int(vmem_limit_bytes)),
    )(params, x)
    return out


# --------------------------- SpecAug module glue --------------------------- #

def _resolve_mask_range(D, mask_range, mask_ratio_range):
    if mask_range is None:
        lo = max(0, math.floor(mask_ratio_range[0] * D))
        hi = min(D, math.floor(mask_ratio_range[1] * D))
        mask_range = (lo, hi)
    return mask_range


def _sample_masks(key, batch, D, num_masks, mask_range, mask_ratio_range):
    """Replicates the torch.randint sampling of mask_along_axis/apply_masking
    (note: like the PyTorch code, the position upper bound uses the GLOBAL max
    of the sampled lengths)."""
    if num_masks == 0:
        z = jnp.zeros((batch, 0), dtype=jnp.int32)
        return z, z
    mask_range = _resolve_mask_range(D, mask_range, mask_ratio_range)
    if mask_range[0] > mask_range[1]:
        warnings.warn('mask_range[0] is greater than mask_range[1]. Swapping.')
        # PyTorch returns x unchanged -> zero-length masks mask nothing.
        z = jnp.zeros((batch, num_masks), dtype=jnp.int32)
        return z, z
    klen, kpos = jax.random.split(key)
    mask_len = jax.random.randint(
        klen, (batch, num_masks), mask_range[0], mask_range[1], dtype=jnp.int32)
    pos_hi = jnp.maximum(1, D - jnp.max(mask_len))
    mask_pos = jax.random.randint(
        kpos, (batch, num_masks), 0, pos_hi, dtype=jnp.int32)
    return mask_pos, mask_len


class SpecAug:
    """JAX/Pallas port of the PyTorch SpecAug module (forward semantics)."""

    def __init__(self, num_freq_masks, freq_mask_range, freq_mask_ratio_range,
                 num_time_masks, time_mask_range, time_mask_ratio_range):
        self.num_freq_masks = num_freq_masks
        self.freq_mask_range = freq_mask_range
        self.freq_mask_ratio_range = freq_mask_ratio_range
        self.num_time_masks = num_time_masks
        self.time_mask_range = time_mask_range
        self.time_mask_ratio_range = time_mask_ratio_range

    def __call__(self, x, key):
        B, F, T = x.shape
        kf, kt = jax.random.split(key)
        fpos, flen = _sample_masks(kf, B, F, self.num_freq_masks,
                                   self.freq_mask_range,
                                   self.freq_mask_ratio_range)
        tpos, tlen = _sample_masks(kt, B, T, self.num_time_masks,
                                   self.time_mask_range,
                                   self.time_mask_ratio_range)
        return specaug_pallas(x, fpos, flen, tpos, tlen)


# ------------------------------ reference ---------------------------------- #

def _reference(x, fpos, flen, tpos, tlen):
    """Pure-JAX re-implementation of the masked_fill semantics."""
    B, F, T = x.shape
    fidx = jnp.arange(F)[None, None, :]
    fmask = ((fpos[:, :, None] <= fidx)
             & (fidx < fpos[:, :, None] + flen[:, :, None])).any(axis=1)  # (B,F)
    tidx = jnp.arange(T)[None, None, :]
    tmask = ((tpos[:, :, None] <= tidx)
             & (tidx < tpos[:, :, None] + tlen[:, :, None])).any(axis=1)  # (B,T)
    mask = fmask[:, :, None] | tmask[:, None, :]
    return jnp.where(mask, jnp.zeros_like(x), x)


# --------------------------------- main ------------------------------------ #

if __name__ == "__main__":
    key = jax.random.PRNGKey(0)
    kx, kaug = jax.random.split(key)

    # --- main test: module-sized small shape ------------------------------ #
    B, F, T = 2, 16, 64
    x = jax.random.normal(kx, (B, F, T), dtype=jnp.float32)

    spec_aug = SpecAug(
        num_freq_masks=2, freq_mask_range=None,
        freq_mask_ratio_range=(0.05, 0.3),
        num_time_masks=2, time_mask_range=(1, 8),
        time_mask_ratio_range=None,
    )

    kf, kt = jax.random.split(kaug)
    fpos, flen = _sample_masks(kf, B, F, spec_aug.num_freq_masks,
                               spec_aug.freq_mask_range,
                               spec_aug.freq_mask_ratio_range)
    tpos, tlen = _sample_masks(kt, B, T, spec_aug.num_time_masks,
                               spec_aug.time_mask_range,
                               spec_aug.time_mask_ratio_range)

    out = jax.block_until_ready(specaug_pallas(x, fpos, flen, tpos, tlen))
    ref = _reference(x, fpos, flen, tpos, tlen)
    assert out.shape == x.shape and out.dtype == x.dtype
    assert jnp.allclose(out, ref), "Pallas SpecAug mismatch vs reference"

    # Module-level API (same key -> same masks).
    out2 = jax.block_until_ready(spec_aug(x, kaug))
    assert out2.shape == x.shape
    assert jnp.allclose(out2, ref), "SpecAug module path mismatch vs reference"

    # --- tiled-T path: T not a multiple of 128, forced tiny block budget --- #
    B2, F2, T2 = 3, 16, 200
    k2, k2f, k2t = jax.random.split(jax.random.PRNGKey(1), 3)
    x2 = jax.random.normal(k2, (B2, F2, T2), dtype=jnp.float32)
    f2pos, f2len = _sample_masks(k2f, B2, F2, 2, None, (0.05, 0.3))
    t2pos, t2len = _sample_masks(k2t, B2, T2, 2, (5, 30), None)
    out_t = jax.block_until_ready(
        specaug_pallas(x2, f2pos, f2len, t2pos, t2len,
                       target_block_bytes=F2 * 128 * 4))  # forces tile_t=128
    ref2 = _reference(x2, f2pos, f2len, t2pos, t2len)
    assert jnp.allclose(out_t, ref2), "tiled-T path mismatch vs reference"

    # --- batch-fold path: bb does not divide B (ragged batch edge block) --- #
    B3, F3, T3 = 7, 16, 64
    k3, k3f, k3t = jax.random.split(jax.random.PRNGKey(2), 3)
    x3 = jax.random.normal(k3, (B3, F3, T3), dtype=jnp.float32)
    f3pos, f3len = _sample_masks(k3f, B3, F3, 2, (1, 5), None)
    t3pos, t3len = _sample_masks(k3t, B3, T3, 2, (1, 8), None)
    out_b = jax.block_until_ready(
        specaug_pallas(x3, f3pos, f3len, t3pos, t3len))
    ref3 = _reference(x3, f3pos, f3len, t3pos, t3len)
    assert jnp.allclose(out_b, ref3), "batch-fold path mismatch vs reference"

    print("KERNEL_OK")
</pallas_src>

<mosaic_0001>
module attributes {stable_mosaic.version = 11 : i64} {
  func.func @_specaug_kernel(%arg0: i32, %arg1: i32, %arg2: memref<8x2xi32, #tpu.memory_space<smem>>, %arg3: memref<1x16x64xf32, #tpu.memory_space<vmem>>, %arg4: memref<1x16x64xf32, #tpu.memory_space<vmem>>) attributes {dimension_semantics = [#tpu.dimension_semantics<parallel>, #tpu.dimension_semantics<parallel>], iteration_bounds = array<i64: 2, 1>, scalar_prefetch = 1 : i64, scratch_operands = 0 : i64, tpu.core_type = #tpu.core_type<tc>, window_params = [{transform_indices = @transform_0, window_bounds = array<i64: 1, 16, 64>}, {transform_indices = @transform_1, window_bounds = array<i64: 1, 16, 64>}]} {
    %c64_i32 = arith.constant 64 : i32
    %0 = arith.muli %arg1, %c64_i32 : i32
    %1 = tpu.iota {dimensions = array<i32: 0>} : vector<16x1xi32>
    %2 = tpu.iota {dimensions = array<i32: 1>} : vector<1x64xi32>
    %3 = vector.broadcast %0 : i32 to vector<1x64xi32>
    %4 = arith.addi %2, %3 : vector<1x64xi32>
    %c1_i32 = arith.constant 1 : i32
    %5 = arith.muli %arg0, %c1_i32 : i32
    %c0_i32 = arith.constant 0 : i32
    %6 = arith.addi %5, %c0_i32 : i32
    %false = arith.constant false
    %7 = vector.broadcast %false : i1 to vector<16x1xi1>
    %c0 = arith.constant 0 : index
    %8 = arith.index_cast %6 : i32 to index
    %9 = memref.load %arg2[%c0, %8] : memref<8x2xi32, #tpu.memory_space<smem>>
    %c2 = arith.constant 2 : index
    %10 = arith.index_cast %6 : i32 to index
    %11 = memref.load %arg2[%c2, %10] : memref<8x2xi32, #tpu.memory_space<smem>>
    %12 = vector.broadcast %9 : i32 to vector<16x1xi32>
    %13 = arith.cmpi sge, %1, %12 : vector<16x1xi32>
    %14 = arith.addi %9, %11 : i32
    %15 = vector.broadcast %14 : i32 to vector<16x1xi32>
    %16 = arith.cmpi slt, %1, %15 : vector<16x1xi32>
    %17 = arith.andi %13, %16 : vector<16x1xi1>
    %18 = arith.ori %7, %17 : vector<16x1xi1>
    %c1 = arith.constant 1 : index
    %19 = arith.index_cast %6 : i32 to index
    %20 = memref.load %arg2[%c1, %19] : memref<8x2xi32, #tpu.memory_space<smem>>
    %c3 = arith.constant 3 : index
    %21 = arith.index_cast %6 : i32 to index
    %22 = memref.load %arg2[%c3, %21] : memref<8x2xi32, #tpu.memory_space<smem>>
    %23 = vector.broadcast %20 : i32 to vector<16x1xi32>
    %24 = arith.cmpi sge, %1, %23 : vector<16x1xi32>
    %25 = arith.addi %20, %22 : i32
    %26 = vector.broadcast %25 : i32 to vector<16x1xi32>
    %27 = arith.cmpi slt, %1, %26 : vector<16x1xi32>
    %28 = arith.andi %24, %27 : vector<16x1xi1>
    %29 = arith.ori %18, %28 : vector<16x1xi1>
    %false_0 = arith.constant false
    %30 = vector.broadcast %false_0 : i1 to vector<1x64xi1>
    %c4 = arith.constant 4 : index
    %31 = arith.index_cast %6 : i32 to index
    %32 = memref.load %arg2[%c4, %31] : memref<8x2xi32, #tpu.memory_space<smem>>
    %c6 = arith.constant 6 : index
    %33 = arith.index_cast %6 : i32 to index
    %34 = memref.load %arg2[%c6, %33] : memref<8x2xi32, #tpu.memory_space<smem>>
    %35 = vector.broadcast %32 : i32 to vector<1x64xi32>
    %36 = arith.cmpi sge, %4, %35 : vector<1x64xi32>
    %37 = arith.addi %32, %34 : i32
    %38 = vector.broadcast %37 : i32 to vector<1x64xi32>
    %39 = arith.cmpi slt, %4, %38 : vector<1x64xi32>
    %40 = arith.andi %36, %39 : vector<1x64xi1>
    %41 = arith.ori %30, %40 : vector<1x64xi1>
    %c5 = arith.constant 5 : index
    %42 = arith.index_cast %6 : i32 to index
    %43 = memref.load %arg2[%c5, %42] : memref<8x2xi32, #tpu.memory_space<smem>>
    %c7 = arith.constant 7 : index
    %44 = arith.index_cast %6 : i32 to index
    %45 = memref.load %arg2[%c7, %44] : memref<8x2xi32, #tpu.memory_space<smem>>
    %46 = vector.broadcast %43 : i32 to vector<1x64xi32>
    %47 = arith.cmpi sge, %4, %46 : vector<1x64xi32>
    %48 = arith.addi %43, %45 : i32
    %49 = vector.broadcast %48 : i32 to vector<1x64xi32>
    %50 = arith.cmpi slt, %4, %49 : vector<1x64xi32>
    %51 = arith.andi %47, %50 : vector<1x64xi1>
    %52 = arith.ori %41, %51 : vector<1x64xi1>
    %53 = vector.broadcast %29 : vector<16x1xi1> to vector<16x64xi1>
    %54 = vector.broadcast %52 : vector<1x64xi1> to vector<16x64xi1>
    %55 = arith.ori %53, %54 : vector<16x64xi1>
    %c0_1 = arith.constant 0 : index
    %c0_2 = arith.constant 0 : index
    %c0_3 = arith.constant 0 : index
    %56 = vector.load %arg3[%c0_1, %c0_2, %c0_3] : memref<1x16x64xf32, #tpu.memory_space<vmem>>, vector<1x16x64xf32>
    %57 = vector.shape_cast %56 : vector<1x16x64xf32> to vector<16x64xf32>
    %cst = arith.constant 0.000000e+00 : f32
    %58 = vector.broadcast %cst : f32 to vector<16x64xf32>
    %59 = arith.select %55, %58, %57 : vector<16x64xi1>, vector<16x64xf32>
    %c0_4 = arith.constant 0 : index
    %c0_5 = arith.constant 0 : index
    %c0_6 = arith.constant 0 : index
    %60 = vector.load %arg4[%c0_4, %c0_5, %c0_6] : memref<1x16x64xf32, #tpu.memory_space<vmem>>, vector<1x16x64xf32>
    %61 = vector.shape_cast %60 : vector<1x16x64xf32> to vector<16x64xf32>
    %62 = vector.shape_cast %59 : vector<16x64xf32> to vector<1x16x64xf32>
    tpu.vector_store %arg4[%c0_4, %c0_5, %c0_6], %62 {strides = array<i32>} : memref<1x16x64xf32, #tpu.memory_space<vmem>>, vector<1x16x64xf32>,
    return
  }
  func.func @transform_0(%arg0: i32, %arg1: i32, %arg2: memref<8x2xi32, #tpu.memory_space<smem>>) -> (i32, i32, i32) {
    %c0_i32 = arith.constant 0 : i32
    %c0_i32_0 = arith.constant 0 : i32
    return %arg0, %c0_i32, %arg1 : i32, i32, i32
  }
  func.func @transform_1(%arg0: i32, %arg1: i32, %arg2: memref<8x2xi32, #tpu.memory_space<smem>>) -> (i32, i32, i32) {
    %c0_i32 = arith.constant 0 : i32
    %c0_i32_0 = arith.constant 0 : i32
    return %arg0, %c0_i32, %arg1 : i32, i32, i32
  }
}

</mosaic_0001>

<llo_original>
// kernel: tpu_custom_call.1
$region0: #{tpu_custom_call.1}
  #allocation0 [shape = 'u32[]', space=smem, size = 0x4, offset = 0x4, fixed_abs, tag = 'smem constant byte address 0x4 - core index']
  #allocation1 [shape = 'u32[144,128]{1,0:T(1,128)}', space=vmem, size = 0x12000, scoped, tag = 'internal scratch']
  #allocation2 [shape = 's32[1]{0}', space=sflag, size = 0x4, scoped, tag = 'scoped memory for tpu_custom_call.1']
  #allocation3 [shape = 'u8[4096]{0}', space=smem, size = 0x1000, scoped, tag = 'prefetched SMEM operand 0']
  %s0 = inlined_call_operand.vmem [shape: s32[8,2], index: 0, kind: input, shape index: {}]
  %s1 = inlined_call_operand.hbm [shape: f32[2,16,64], index: 1, kind: input, shape index: {}]
  %s2 = inlined_call_operand.hbm [shape: f32[2,16,64], index: 2, kind: output, shape index: {}]
  %s3 = sld [smem:[#allocation0]]
  $region41: #{tpu_custom_call.1} parent=0
    _
  %s5 = ssub.s32 1, %s3
  %s6 = scalar_select 0, %s5, %s3
  %s7 = sshll.u32 %s0, 4
  %s8 = int_to_ptr.vmem [resolvable:$true] %s7
  %10 = dma.vmem_to_smem %s8, 128, [#allocation3], [#allocation2]
  %11 = dma.done [#allocation2], 128
  %12 = sfence
  $region1: #{tpu_custom_call.1} parent=0
    #allocation4 [shape = 'u8[16384]{0}', space=vmem, size = 0x4000, scoped, tag = 'input window, operand 1']
    #allocation5 [shape = 's32[2]{0}', space=sflag, size = 0x8, scoped, tag = 'scoped memory for tpu_custom_call.1']
    #allocation6 [shape = 's32[2]{0}', space=sflag, size = 0x8, scoped, tag = 'scoped memory for tpu_custom_call.1']
    #allocation7 [shape = 'u8[16384]{0}', space=vmem, size = 0x4000, scoped, tag = 'output window, operand 0']
    %13 = vsyncpa [#allocation5], 0
    %s14 = scalar_lea.sflag [#allocation5], 1
    %15 = vsyncpa %s14, 0
    %16 = vsyncpa [#allocation6], 0
    %s17 = scalar_lea.sflag [#allocation6], 1
    %18 = vsyncpa %s17, 0
    loop: start=0, step=1, limit=4
    $region2: #{tpu_custom_call.1} parent=1 // loop_pre_header
      _
    $region3: #{tpu_custom_call.1} parent=1 // loop_header
      %s20 = sphi 0, %s24
      %p21 = scmp.ge.s32.totalorder %s20, 4
      %s27 = sphi 0, %s39
      %s28 = sphi 0, %s35
      %s29 = sphi 0, %s27
      %s30 = sphi 0, %s28
      %s31 = sphi 0, %s29
      %s32 = sphi 0, %s30
      %s44 = sphi 0, %s46
      %s47 = sphi 0, %s44
      %s48 = sphi 0, %s47
      %s64 = sphi 0, %s48
      %s72 = sphi 0, %s74
      %s75 = sphi 0, %s72
      %s76 = sphi 0, %s75
      %s92 = sphi 0, %s76
    $region4: #{tpu_custom_call.1} parent=1 // loop_header_branch
      %23 = sbr.rel (%p21) target = $region8
    $region5: #{tpu_custom_call.1} parent=1 // loop_body
      %s25 = ssub.s32 %s20, 1
      %s26 = ssub.s32 %s20, 2
      %s33 = sadd.s32 1, %s28
      %p34 = scmp.ge.s32.totalorder %s33, 1
      %s35 = scalar_select %p34, 0, %s33
      %s36 = sadd.s32 1, %s27
      %s37 = scalar_select %p34, %s36, %s27
      %p38 = scmp.ge.s32.totalorder %s37, 2
      %s39 = scalar_select %p38, 0, %s37
      %s40 = ssub.s32 %s27, %s39
      %s41 = ssub.s32 %s28, %s35
      %s42 = sor.u32 %s40, %s41
      %p43 = scmp.eq.s32.totalorder %s42, 0
      %s45 = sadd.s32 %s44, 1
      %s46 = scalar_select %p43, %s44, %s45
      %p49 = pneg %p43
      %p50 = scmp.eq.s32.totalorder %s20, 1
      %p51 = por %p49, %p50
      %p52 = scmp.ne.s32.totalorder %s44, %s47
      %p53 = scmp.eq.s32.totalorder %s20, 0
      %p54 = por %p52, %p53
      %p55 = scmp.ne.s32.totalorder %s44, %s47
      %p56 = scmp.eq.s32.totalorder %s25, 1
      %p57 = por %p55, %p56
      %p58 = scmp.ne.s32.totalorder %s47, %s48
      %p59 = scmp.eq.s32.totalorder %s25, 0
      %p60 = por %p58, %p59
      %p61 = scmp.ne.s32.totalorder %s47, %s48
      %p62 = scmp.eq.s32.totalorder %s26, 1
      %p63 = por %p61, %p62
      %p65 = scmp.ne.s32.totalorder %s48, %s64
      %p66 = scmp.eq.s32.totalorder %s26, 0
      %p67 = por %p65, %p66
      %s68 = ssub.s32 %s27, %s39
      %s69 = ssub.s32 %s28, %s35
      %s70 = sor.u32 %s68, %s69
      %p71 = scmp.eq.s32.totalorder %s70, 0
      %s73 = sadd.s32 %s72, 1
      %s74 = scalar_select %p71, %s72, %s73
      %p77 = pneg %p71
      %p78 = scmp.eq.s32.totalorder %s20, 1
      %p79 = por %p77, %p78
      %p80 = scmp.ne.s32.totalorder %s72, %s75
      %p81 = scmp.eq.s32.totalorder %s20, 0
      %p82 = por %p80, %p81
      %p83 = scmp.ne.s32.totalorder %s72, %s75
      %p84 = scmp.eq.s32.totalorder %s25, 1
      %p85 = por %p83, %p84
      %p86 = scmp.ne.s32.totalorder %s75, %s76
      %p87 = scmp.eq.s32.totalorder %s25, 0
      %p88 = por %p86, %p87
      %p89 = scmp.ne.s32.totalorder %s75, %s76
      %p90 = scmp.eq.s32.totalorder %s26, 1
      %p91 = por %p89, %p90
      %p93 = scmp.ne.s32.totalorder %s76, %s92
      %p94 = scmp.eq.s32.totalorder %s26, 0
      %p95 = por %p93, %p94
      %p96 = scmp.le.s32.totalorder 1, %s20
      %p97 = scmp.lt.s32.totalorder %s20, 3
      %p98 = pnand %p96, %p97
      %p99 = pneg %p98
      // Predicated region
      $region9: #{tpu_custom_call.1} parent=5 // pred_check
        _
      $region10: #{tpu_custom_call.1} parent=5 // pred_check_branch
        %101 = sbr.rel (%p98) target = $region12
      $region11: #{tpu_custom_call.1} parent=5 // pred_region
        %s102 = ssub.s32 %s20, 1
      $region12: #{tpu_custom_call.1} parent=5 // pred_fallthru
        _
      %p103 = scmp.lt.s32.totalorder %s20, 2
      // Predicated region
      $region13: #{tpu_custom_call.1} parent=5 // pred_check
        %p104 = pneg %p103
      $region14: #{tpu_custom_call.1} parent=5 // pred_check_branch
        %106 = sbr.rel (%p104) target = $region16
      $region15: #{tpu_custom_call.1} parent=5 // pred_region
        // Predicated region
        $region17: #{tpu_custom_call.1} parent=15 // pred_check
          %p107 = pneg %p54
        $region18: #{tpu_custom_call.1} parent=15 // pred_check_branch
          %109 = sbr.rel (%p107) target = $region20
        $region19: #{tpu_custom_call.1} parent=15 // pred_region
          %s110 = sand.u32 %s44, 1
          %s111 = scalar_lea.sflag [#allocation5], %s110
          %s112 = sand.u32 %s44, 1
          %s113 = smul.addr %s112, 16
          %s114 = scalar_lea.vmem [#allocation4], %s113
          %s116 = ssub.s32 256, 256
          %117 = vsyncadd %s111, %s116
          %s118 = smul.addr %s27, 2
          %s119 = sadd.s32 %s28, %s118
          %s120 = smul.addr %s119, 128
          %s121 = scalar_lea.hbm %s1, %s120
          %s122 = sshll.u32 %s114, 4
          %s123 = int_to_ptr.vmem [resolvable:$true] %s122
          %128 = dma.hbm_to_vmem [thread:$0]  %s121, 256, %s123, %s111, 128, 128, 8
        $region20: #{tpu_custom_call.1} parent=15 // pred_fallthru
          _
      $region16: #{tpu_custom_call.1} parent=5 // pred_fallthru
        _
      %p129 = scmp.le.s32.totalorder 1, %s20
      %p130 = scmp.lt.s32.totalorder %s20, 3
      %p131 = pnand %p129, %p130
      %p132 = pneg %p131
      // Predicated region
      $region21: #{tpu_custom_call.1} parent=5 // pred_check
        _
      $region22: #{tpu_custom_call.1} parent=5 // pred_check_branch
        %134 = sbr.rel (%p131) target = $region24
      $region23: #{tpu_custom_call.1} parent=5 // pred_region
        %s135 = ssub.s32 %s20, 1
        %s136 = sand.u32 %s47, 1
        %s137 = scalar_lea.sflag [#allocation5], %s136
        %s138 = sand.u32 %s47, 1
        %s139 = smul.addr %s138, 16
        %s140 = scalar_lea.vmem [#allocation4], %s139
        // Predicated region
        $region25: #{tpu_custom_call.1} parent=23 // pred_check
          %p141 = pneg %p60
        $region26: #{tpu_custom_call.1} parent=23 // pred_check_branch
          %143 = sbr.rel (%p141) target = $region28
        $region27: #{tpu_custom_call.1} parent=23 // pred_region
          %144 = dma.done %s137, 256
        $region28: #{tpu_custom_call.1} parent=23 // pred_fallthru
          _
        %s145 = sand.u32 %s47, 1
        %s146 = scalar_lea.sflag [#allocation5], %s145
        %s147 = sand.u32 %s47, 1
        %s148 = smul.addr %s147, 16
        %s149 = scalar_lea.vmem [#allocation4], %s148
        %p150 = pneg %p60
        %p151 = pneg %p57
        %p152 = pneg %p88
        %p153 = pneg %p85
        %s154 = sand.u32 %s75, 1
        %s155 = scalar_lea.sflag [#allocation6], %s154
        %s156 = sand.u32 %s75, 1
        %s157 = smul.addr %s156, 16
        %s158 = scalar_lea.vmem [#allocation7], %s157
        %s159 = smul.u32 %s30, 64
        %v160 = vlaneseq
        %v161 = vshrl.u32 %v160, 7
        %v162 = vadd.s32 %v161, 8
        %v163 = vlaneseq
        %v164 = vand.u32 %v163, 127
        %v165 = vstv %s159
        %v166 = vadd.s32 %v164, %v165
        %s167 = sld [smem:[#allocation3 + %s29]]
        %s168 = sshra.s32 %s29, 7
        %s169 = sand.u32 %s29, 127
        %s170 = sadd.s32 %s168, 2
        %s171 = smul.u32 %s170, 128
        %s172 = sshra.s32 %s29, 7
        %s173 = sand.u32 %s29, 127
        %s174 = sadd.s32 %s171, %s173
        %s175 = sld [smem:[#allocation3 + %s174]]
        %v176 = vstv %s167
        %vm177 = vcmp.ge.s32.totalorder %v161, %v176
        %vm178 = vcmp.ge.s32.totalorder %v162, %v176
        %s179 = sadd.s32 %s167, %s175
        %v180 = vstv %s179
        %vm181 = vcmp.lt.s32.totalorder %v161, %v180
        %vm182 = vcmp.lt.s32.totalorder %v162, %v180
        %vm183 = vmand %vm177, %vm181
        %vm184 = vmand %vm178, %vm182
        %s185 = sadd.s32 %s168, 1
        %s186 = smul.u32 %s185, 128
        %s187 = sadd.s32 %s186, %s173
        %s188 = sld [smem:[#allocation3 + %s187]]
        %s189 = sadd.s32 %s168, 3
        %s190 = smul.u32 %s189, 128
        %s191 = sadd.s32 %s190, %s173
        %s192 = sld [smem:[#allocation3 + %s191]]
        %v193 = vstv %s188
        %vm194 = vcmp.ge.s32.totalorder %v161, %v193
        %vm195 = vcmp.ge.s32.totalorder %v162, %v193
        %s196 = sadd.s32 %s188, %s192
        %v197 = vstv %s196
        %vm198 = vcmp.lt.s32.totalorder %v161, %v197
        %vm199 = vcmp.lt.s32.totalorder %v162, %v197
        %vm200 = vmand %vm194, %vm198
        %vm201 = vmand %vm195, %vm199
        %vm202 = vmor %vm183, %vm200
        %vm203 = vmor %vm184, %vm201
        %s204 = sadd.s32 %s168, 4
        %s205 = smul.u32 %s204, 128
        %s206 = sadd.s32 %s205, %s173
        %s207 = sld [smem:[#allocation3 + %s206]]
        %s208 = sadd.s32 %s168, 6
        %s209 = smul.u32 %s208, 128
        %s210 = sadd.s32 %s209, %s173
        %s211 = sld [smem:[#allocation3 + %s210]]
        %v212 = vstv %s207
        %vm213 = vcmp.ge.s32.totalorder %v166, %v212
        %s214 = sadd.s32 %s207, %s211
        %v215 = vstv %s214
        %vm216 = vcmp.lt.s32.totalorder %v166, %v215
        %vm217 = vmand %vm213, %vm216
        %s218 = sadd.s32 %s168, 5
        %s219 = smul.u32 %s218, 128
        %s220 = sadd.s32 %s219, %s173
        %s221 = sld [smem:[#allocation3 + %s220]]
        %s222 = sadd.s32 %s168, 7
        %s223 = smul.u32 %s222, 128
        %s224 = sadd.s32 %s223, %s173
        %s225 = sld [smem:[#allocation3 + %s224]]
        %v226 = vstv %s221
        %vm227 = vcmp.ge.s32.totalorder %v166, %v226
        %s228 = sadd.s32 %s221, %s225
        %v229 = vstv %s228
        %vm230 = vcmp.lt.s32.totalorder %v166, %v229
        %vm231 = vmand %vm227, %vm230
        %vm232 = vmor %vm217, %vm231
        %v233 = vsel %vm202, 1, 0
        %v234 = vsel %vm203, 1, 0
        %vm235 = vcmp.eq.s32.totalorder %v233, 1
        %vm236 = vcmp.eq.s32.totalorder %v234, 1
        %v237 = vsel %vm232, 1, 0
        %vm238 = vcmp.eq.s32.totalorder %v237, 1
        %vm239 = vmor %vm235, %vm238
        %vm240 = vmor %vm236, %vm238
        %v241 = vld [vmem:[%s140] sm:$0xff]
        %v242 = vld [vmem:[%s140 + $0x8] sm:$0xff]
        %v243 = vsel %vm239, 0.0, %v241
        %v244 = vsel %vm240, 0.0, %v242
        %vm245 = vcmask 523264
        %246 = vst.msk [vmem:[%s158] sm:$0xff] %vm245, %v243
        %247 = vst.msk [vmem:[%s158 + $0x8] sm:$0xff] %vm245, %v244
        %s248 = sand.u32 %s75, 1
        %s249 = scalar_lea.sflag [#allocation6], %s248
        %s250 = sand.u32 %s75, 1
        %s251 = smul.addr %s250, 16
        %s252 = scalar_lea.vmem [#allocation7], %s251
        // Predicated region
        $region29: #{tpu_custom_call.1} parent=23 // pred_check
          %p253 = pneg %p85
        $region30: #{tpu_custom_call.1} parent=23 // pred_check_branch
          %255 = sbr.rel (%p253) target = $region32
        $region31: #{tpu_custom_call.1} parent=23 // pred_region
          %s257 = ssub.s32 256, 256
          %258 = vsyncadd %s249, %s257
          %s259 = smul.addr %s29, 2
          %s260 = sadd.s32 %s30, %s259
          %s261 = smul.addr %s260, 128
          %s262 = scalar_lea.hbm %s2, %s261
          %s263 = sshll.u32 %s252, 4
          %s264 = int_to_ptr.vmem [resolvable:$true] %s263
          %269 = dma.vmem_to_hbm [thread:$0]  %s264, 256, %s262, %s249, 128, 128, 8
        $region32: #{tpu_custom_call.1} parent=23 // pred_fallthru
          _
      $region24: #{tpu_custom_call.1} parent=5 // pred_fallthru
        _
      %p270 = scmp.le.s32.totalorder 2, %s20
      // Predicated region
      $region33: #{tpu_custom_call.1} parent=5 // pred_check
        %p271 = pneg %p270
      $region34: #{tpu_custom_call.1} parent=5 // pred_check_branch
        %273 = sbr.rel (%p271) target = $region36
      $region35: #{tpu_custom_call.1} parent=5 // pred_region
        %s274 = ssub.s32 %s20, 2
        // Predicated region
        $region37: #{tpu_custom_call.1} parent=35 // pred_check
          %p275 = pneg %p91
        $region38: #{tpu_custom_call.1} parent=35 // pred_check_branch
          %277 = sbr.rel (%p275) target = $region40
        $region39: #{tpu_custom_call.1} parent=35 // pred_region
          %s278 = sand.u32 %s76, 1
          %s279 = scalar_lea.sflag [#allocation6], %s278
          %s280 = sand.u32 %s76, 1
          %s281 = smul.addr %s280, 16
          %s282 = scalar_lea.vmem [#allocation7], %s281
          %283 = dma.done %s279, 256
        $region40: #{tpu_custom_call.1} parent=35 // pred_fallthru
          _
      $region36: #{tpu_custom_call.1} parent=5 // pred_fallthru
        _
    $region6: #{tpu_custom_call.1} parent=1 // loop_footer
      %s24 = sadd.s32 1, %s20
    $region7: #{tpu_custom_call.1} parent=1 // loop_footer_branch
      %19 = sbr.rel target = $region3
    $region8: #{tpu_custom_call.1} parent=1 // loop_exit
      _
    %284 = vsyncpa [#allocation5], 1
    %s285 = scalar_lea.sflag [#allocation5], 1
    %286 = vsyncpa %s285, 1
    %287 = vsyncpa [#allocation6], 1
    %s288 = scalar_lea.sflag [#allocation6], 1
    %289 = vsyncpa %s288, 1

</llo_original>
